<compile_context>
chip_gen: v7x
topology: tpu7x:2x2x1
jax: 0.10.0
libtpu: 0.0.40
codegen_flags: <defaults>
</compile_context>

<pallas_src>
import jax
import jax.numpy as jnp
from jax import lax
from jax.experimental import pallas as pl
from jax.experimental.pallas import tpu as pltpu


def _round_up(x, m):
    return ((x + m - 1) // m) * m


def _fused_q_kernel(obs_ref, act_ref, w1o_ref, w1a_ref, b1_ref,
                    w2_ref, b2_ref, w3_ref, b3_ref, o_ref):
    # Layer 1: concat([obs, act]) @ W1  ==  obs @ W1_obs + act @ W1_act
    h1 = jnp.dot(obs_ref[...], w1o_ref[...], preferred_element_type=jnp.float32)
    h1 = h1 + jnp.dot(act_ref[...], w1a_ref[...],
                      preferred_element_type=jnp.float32)
    h1 = jnp.maximum(h1 + b1_ref[...], 0.0)          # f32 bias + ReLU epilogue
    h1 = h1.astype(w2_ref.dtype)                     # bf16 for the next MXU op

    # Layer 2
    h2 = jnp.dot(h1, w2_ref[...], preferred_element_type=jnp.float32)
    h2 = jnp.maximum(h2 + b2_ref[...], 0.0)
    h2 = h2.astype(w3_ref.dtype)

    # Layer 3 (out_features == 1): contract the hidden dim of h2 with the
    # (1, 256) weight row in transposed orientation -> lane-dense (1, TM) row.
    q = lax.dot_general(w3_ref[...], h2,
                        dimension_numbers=(((1,), (1,)), ((), ())),
                        preferred_element_type=jnp.float32)      # (1, TM)
    o_ref[...] = q + b3_ref[0, 0]


def _pad_rows(x, n_pad):
    n = x.shape[0]
    if n_pad == n:
        return x
    return jnp.pad(x, ((0, n_pad - n), (0, 0)))


def _run_fused_mlp(obs2d, act2d, params, *, tile_rows=512):
    """obs2d: [N, O], act2d: [N, A]. Returns q: [N] float32."""
    w1o, w1a, b1, w2, b2, w3, b3 = params
    n, o_dim = obs2d.shape
    a_dim = act2d.shape[1]
    cdt = w1o.dtype                                   # bf16

    tile_rows = _round_up(tile_rows, 128)
    tm = min(tile_rows, _round_up(n, 128))            # 128-row aligned tiles
    n_pad = _round_up(n, tm)
    num_tiles = n_pad // tm

    obs_p = _pad_rows(obs2d.astype(cdt), n_pad)
    act_p = _pad_rows(act2d.astype(cdt), n_pad)

    def const_spec(a):                                # weight stays resident
        return pl.BlockSpec(a.shape, lambda i: (0,) * a.ndim)

    out = pl.pallas_call(
        _fused_q_kernel,
        out_shape=jax.ShapeDtypeStruct((1, n_pad), jnp.float32),
        grid_spec=pltpu.PrefetchScalarGridSpec(
            num_scalar_prefetch=0,
            grid=(num_tiles,),
            in_specs=[
                pl.BlockSpec((tm, o_dim), lambda i: (i, 0)),     # obs tile
                pl.BlockSpec((tm, a_dim), lambda i: (i, 0)),     # act tile
                const_spec(w1o), const_spec(w1a), const_spec(b1),
                const_spec(w2), const_spec(b2), const_spec(w3),
                pl.BlockSpec(memory_space=pltpu.MemorySpace.SMEM),  # b3 scalar
            ],
            out_specs=pl.BlockSpec((1, tm), lambda i: (0, i)),   # lane-dense
        ),
        compiler_params=pltpu.CompilerParams(
            dimension_semantics=("parallel",),        # v7x megacore sharding
            vmem_limit_bytes=32 * 1024 * 1024,
        ),
    )(obs_p, act_p, w1o, w1a, b1, w2, b2, w3, b3)
    return out.reshape(-1)[:n]


class FullyConnectedQFunctionPallas:
    """JAX/Pallas port of FullyConnectedQFunction (arch '256-256', output 1)."""

    def __init__(self, observation_dim, action_dim, arch="256-256", key=None,
                 tile_rows=512):
        self.observation_dim = observation_dim
        self.action_dim = action_dim
        self.arch = arch
        self.tile_rows = tile_rows

        hidden_sizes = [int(h) for h in arch.split("-")]
        if len(hidden_sizes) != 2:
            raise NotImplementedError(
                "fused Pallas kernel implements the default two-hidden-layer arch")
        h1_dim, h2_dim = hidden_sizes

        if key is None:
            key = jax.random.PRNGKey(0)

        def linear_init(k, d_in, d_out):
            kw, kb = jax.random.split(k)
            bound = 1.0 / (d_in ** 0.5)               # nn.Linear default init
            w = jax.random.uniform(kw, (d_in, d_out), jnp.float32, -bound, bound)
            b = jax.random.uniform(kb, (1, d_out), jnp.float32, -bound, bound)
            return w, b

        k1, k2, k3 = jax.random.split(key, 3)
        d_in = observation_dim + action_dim
        w1, b1 = linear_init(k1, d_in, h1_dim)
        w2, b2 = linear_init(k2, h1_dim, h2_dim)
        w3, b3 = linear_init(k3, h2_dim, 1)

        cdt = jnp.bfloat16
        # Weights bf16 (MXU fast path); biases stay f32 (f32 epilogue).
        self.params = (
            w1[:observation_dim].astype(cdt),         # W1_obs [O, 256]
            w1[observation_dim:].astype(cdt),         # W1_act [A, 256]
            b1,                                       # [1, 256] f32
            w2.astype(cdt),                           # [256, 256]
            b2,                                       # [1, 256] f32
            w3.T.astype(cdt),                         # W3 row [1, 256]
            b3.reshape(1, 1),                         # scalar (SMEM)
        )

    def __call__(self, observations, actions):
        if actions.ndim == 3 and observations.ndim == 2:
            # extend_and_repeat(observations, 1, actions.shape[1])
            # TODO(synk): fold this repeat into the obs BlockSpec index_map
            # (requires repeat | tile_rows) so the [B*R, O] copy is never
            # materialized in HBM; the concat copy is already elided.
            observations = jnp.broadcast_to(
                observations[:, None, :],
                (observations.shape[0], actions.shape[1], observations.shape[1]),
            )
        lead_shape = actions.shape[:-1]
        obs2d = observations.reshape(-1, observations.shape[-1])
        act2d = actions.reshape(-1, actions.shape[-1])
        q = _run_fused_mlp(obs2d, act2d, self.params, tile_rows=self.tile_rows)
        return q.reshape(lead_shape)                  # == squeeze(dim=-1)


def _reference_forward(qf, observations, actions):
    """Pure-JAX reference mirroring the kernel's bf16-weight / f32-accum numerics."""
    if actions.ndim == 3 and observations.ndim == 2:
        observations = jnp.broadcast_to(
            observations[:, None, :],
            (observations.shape[0], actions.shape[1], observations.shape[1]))
    w1o, w1a, b1, w2, b2, w3, b3 = qf.params
    f32 = lambda t: t.astype(jnp.float32)
    q8 = lambda t: t.astype(jnp.bfloat16).astype(jnp.float32)
    x_o, x_a = q8(observations), q8(actions)
    h = jnp.maximum(x_o @ f32(w1o) + x_a @ f32(w1a) + b1, 0.0)
    h = q8(h)
    h = jnp.maximum(h @ f32(w2) + b2, 0.0)
    h = q8(h)
    out = h @ f32(w3).T + b3
    return jnp.squeeze(out, axis=-1)


if __name__ == "__main__":
    obs_dim, act_dim = 16, 8
    B, R = 2, 8

    key = jax.random.PRNGKey(0)
    k_obs, k_act, k_params, k_act2 = jax.random.split(key, 4)
    observations = jax.random.normal(k_obs, (B, obs_dim), jnp.float32)
    actions = jax.random.normal(k_act, (B, R, act_dim), jnp.float32)   # 3-D case

    qf = FullyConnectedQFunctionPallas(obs_dim, act_dim, arch="256-256",
                                       key=k_params)

    q = jax.block_until_ready(qf(observations, actions))
    q_ref = _reference_forward(qf, observations, actions)
    assert q.shape == (B, R), q.shape
    assert jnp.allclose(q, q_ref, atol=1e-2, rtol=1e-2), (
        float(jnp.max(jnp.abs(q - q_ref))))

    # Plain 2-D path (obs [B, O], actions [B, A]).
    actions_2d = jax.random.normal(k_act2, (B, act_dim), jnp.float32)
    q2 = jax.block_until_ready(qf(observations, actions_2d))
    q2_ref = _reference_forward(qf, observations, actions_2d)
    assert q2.shape == (B,), q2.shape
    assert jnp.allclose(q2, q2_ref, atol=1e-2, rtol=1e-2)

    # Multi-tile / parallel-grid path: 384 rows with 128-row tiles -> 3 steps.
    B3, R3 = 4, 96
    obs3 = jax.random.normal(jax.random.PRNGKey(1), (B3, obs_dim), jnp.float32)
    act3 = jax.random.normal(jax.random.PRNGKey(2), (B3, R3, act_dim), jnp.float32)
    qf.tile_rows = 128
    q3 = jax.block_until_ready(qf(obs3, act3))
    q3_ref = _reference_forward(qf, obs3, act3)
    assert q3.shape == (B3, R3), q3.shape
    assert jnp.allclose(q3, q3_ref, atol=1e-2, rtol=1e-2), (
        float(jnp.max(jnp.abs(q3 - q3_ref))))

    print("KERNEL_OK")
</pallas_src>

<mosaic_0001>
module attributes {stable_mosaic.version = 11 : i64} {
  func.func @_fused_q_kernel(%arg0: i32, %arg1: memref<128x16xbf16, #tpu.memory_space<vmem>>, %arg2: memref<128x8xbf16, #tpu.memory_space<vmem>>, %arg3: memref<16x256xbf16, #tpu.memory_space<vmem>>, %arg4: memref<8x256xbf16, #tpu.memory_space<vmem>>, %arg5: memref<1x256xf32, #tpu.memory_space<vmem>>, %arg6: memref<256x256xbf16, #tpu.memory_space<vmem>>, %arg7: memref<1x256xf32, #tpu.memory_space<vmem>>, %arg8: memref<1x256xbf16, #tpu.memory_space<vmem>>, %arg9: memref<1x1xf32, #tpu.memory_space<smem>>, %arg10: memref<1x128xf32, #tpu.memory_space<vmem>>) attributes {dimension_semantics = [#tpu.dimension_semantics<parallel>], iteration_bounds = array<i64: 1>, scalar_prefetch = 0 : i64, scratch_operands = 0 : i64, tpu.core_type = #tpu.core_type<tc>, window_params = [{transform_indices = @transform_0, window_bounds = array<i64: 128, 16>}, {transform_indices = @transform_1, window_bounds = array<i64: 128, 8>}, {pipeline_mode = #tpu.pipeline_mode<synchronous>, transform_indices = @transform_2, window_bounds = array<i64: 16, 256>}, {pipeline_mode = #tpu.pipeline_mode<synchronous>, transform_indices = @transform_3, window_bounds = array<i64: 8, 256>}, {pipeline_mode = #tpu.pipeline_mode<synchronous>, transform_indices = @transform_4, window_bounds = array<i64: 1, 256>}, {pipeline_mode = #tpu.pipeline_mode<synchronous>, transform_indices = @transform_5, window_bounds = array<i64: 256, 256>}, {pipeline_mode = #tpu.pipeline_mode<synchronous>, transform_indices = @transform_6, window_bounds = array<i64: 1, 256>}, {pipeline_mode = #tpu.pipeline_mode<synchronous>, transform_indices = @transform_7, window_bounds = array<i64: 1, 256>}, {transform_indices = @transform_8, window_bounds = array<i64: 1, 1>}, {transform_indices = @transform_9, window_bounds = array<i64: 1, 128>}]} {
    %c0 = arith.constant 0 : index
    %c0_0 = arith.constant 0 : index
    %0 = vector.load %arg1[%c0, %c0_0] : memref<128x16xbf16, #tpu.memory_space<vmem>>, vector<128x16xbf16>
    %c0_1 = arith.constant 0 : index
    %c0_2 = arith.constant 0 : index
    %1 = vector.load %arg3[%c0_1, %c0_2] : memref<16x256xbf16, #tpu.memory_space<vmem>>, vector<16x256xbf16>
    %cst = arith.constant dense<0.000000e+00> : vector<128x256xf32>
    %2 = tpu.matmul %0, %1, %cst {dimension_numbers = #tpu.dot_dimension_numbers<[1], [0], [0], [1], [0, 0, 1, 1], [], []>} : vector<128x16xbf16>, vector<16x256xbf16>, vector<128x256xf32> -> vector<128x256xf32>
    %c0_3 = arith.constant 0 : index
    %c0_4 = arith.constant 0 : index
    %3 = vector.load %arg2[%c0_3, %c0_4] : memref<128x8xbf16, #tpu.memory_space<vmem>>, vector<128x8xbf16>
    %c0_5 = arith.constant 0 : index
    %c0_6 = arith.constant 0 : index
    %4 = vector.load %arg4[%c0_5, %c0_6] : memref<8x256xbf16, #tpu.memory_space<vmem>>, vector<8x256xbf16>
    %cst_7 = arith.constant dense<0.000000e+00> : vector<128x256xf32>
    %5 = tpu.matmul %3, %4, %cst_7 {dimension_numbers = #tpu.dot_dimension_numbers<[1], [0], [0], [1], [0, 0, 1, 1], [], []>} : vector<128x8xbf16>, vector<8x256xbf16>, vector<128x256xf32> -> vector<128x256xf32>
    %6 = arith.addf %2, %5 : vector<128x256xf32>
    %c0_8 = arith.constant 0 : index
    %c0_9 = arith.constant 0 : index
    %7 = vector.load %arg5[%c0_8, %c0_9] : memref<1x256xf32, #tpu.memory_space<vmem>>, vector<1x256xf32>
    %8 = vector.broadcast %7 : vector<1x256xf32> to vector<128x256xf32>
    %9 = arith.addf %6, %8 : vector<128x256xf32>
    %cst_10 = arith.constant 0.000000e+00 : f32
    %10 = vector.broadcast %cst_10 : f32 to vector<128x256xf32>
    %11 = arith.maximumf %9, %10 : vector<128x256xf32>
    %12 = arith.truncf %11 : vector<128x256xf32> to vector<128x256xbf16>
    %c0_11 = arith.constant 0 : index
    %c0_12 = arith.constant 0 : index
    %13 = vector.load %arg6[%c0_11, %c0_12] : memref<256x256xbf16, #tpu.memory_space<vmem>>, vector<256x256xbf16>
    %cst_13 = arith.constant dense<0.000000e+00> : vector<128x256xf32>
    %14 = tpu.matmul %12, %13, %cst_13 {dimension_numbers = #tpu.dot_dimension_numbers<[1], [0], [0], [1], [0, 0, 1, 1], [], []>} : vector<128x256xbf16>, vector<256x256xbf16>, vector<128x256xf32> -> vector<128x256xf32>
    %c0_14 = arith.constant 0 : index
    %c0_15 = arith.constant 0 : index
    %15 = vector.load %arg7[%c0_14, %c0_15] : memref<1x256xf32, #tpu.memory_space<vmem>>, vector<1x256xf32>
    %16 = vector.broadcast %15 : vector<1x256xf32> to vector<128x256xf32>
    %17 = arith.addf %14, %16 : vector<128x256xf32>
    %cst_16 = arith.constant 0.000000e+00 : f32
    %18 = vector.broadcast %cst_16 : f32 to vector<128x256xf32>
    %19 = arith.maximumf %17, %18 : vector<128x256xf32>
    %20 = arith.truncf %19 : vector<128x256xf32> to vector<128x256xbf16>
    %c0_17 = arith.constant 0 : index
    %c0_18 = arith.constant 0 : index
    %21 = vector.load %arg8[%c0_17, %c0_18] : memref<1x256xbf16, #tpu.memory_space<vmem>>, vector<1x256xbf16>
    %cst_19 = arith.constant dense<0.000000e+00> : vector<1x128xf32>
    %22 = tpu.matmul %21, %20, %cst_19 {dimension_numbers = #tpu.dot_dimension_numbers<[1], [1], [0], [0], [0, 0, 1, 0], [], []>} : vector<1x256xbf16>, vector<128x256xbf16>, vector<1x128xf32> -> vector<1x128xf32>
    %c0_20 = arith.constant 0 : index
    %c0_21 = arith.constant 0 : index
    %23 = memref.load %arg9[%c0_20, %c0_21] : memref<1x1xf32, #tpu.memory_space<smem>>
    %24 = vector.broadcast %23 : f32 to vector<1x128xf32>
    %25 = arith.addf %22, %24 : vector<1x128xf32>
    %c0_22 = arith.constant 0 : index
    %c0_23 = arith.constant 0 : index
    %26 = vector.load %arg10[%c0_22, %c0_23] : memref<1x128xf32, #tpu.memory_space<vmem>>, vector<1x128xf32>
    tpu.vector_store %arg10[%c0_22, %c0_23], %25 {strides = array<i32>} : memref<1x128xf32, #tpu.memory_space<vmem>>, vector<1x128xf32>,
    return
  }
  func.func @transform_0(%arg0: i32) -> (i32, i32) {
    %c0_i32 = arith.constant 0 : i32
    %c0_i32_0 = arith.constant 0 : i32
    return %arg0, %c0_i32 : i32, i32
  }
  func.func @transform_1(%arg0: i32) -> (i32, i32) {
    %c0_i32 = arith.constant 0 : i32
    %c0_i32_0 = arith.constant 0 : i32
    return %arg0, %c0_i32 : i32, i32
  }
  func.func @transform_2(%arg0: i32) -> (i32, i32) {
    %c0_i32 = arith.constant 0 : i32
    %c0_i32_0 = arith.constant 0 : i32
    %c0_i32_1 = arith.constant 0 : i32
    return %c0_i32, %c0_i32_0 : i32, i32
  }
  func.func @transform_3(%arg0: i32) -> (i32, i32) {
    %c0_i32 = arith.constant 0 : i32
    %c0_i32_0 = arith.constant 0 : i32
    %c0_i32_1 = arith.constant 0 : i32
    return %c0_i32, %c0_i32_0 : i32, i32
  }
  func.func @transform_4(%arg0: i32) -> (i32, i32) {
    %c0_i32 = arith.constant 0 : i32
    %c0_i32_0 = arith.constant 0 : i32
    %c0_i32_1 = arith.constant 0 : i32
    return %c0_i32, %c0_i32_0 : i32, i32
  }
  func.func @transform_5(%arg0: i32) -> (i32, i32) {
    %c0_i32 = arith.constant 0 : i32
    %c0_i32_0 = arith.constant 0 : i32
    %c0_i32_1 = arith.constant 0 : i32
    return %c0_i32, %c0_i32_0 : i32, i32
  }
  func.func @transform_6(%arg0: i32) -> (i32, i32) {
    %c0_i32 = arith.constant 0 : i32
    %c0_i32_0 = arith.constant 0 : i32
    %c0_i32_1 = arith.constant 0 : i32
    return %c0_i32, %c0_i32_0 : i32, i32
  }
  func.func @transform_7(%arg0: i32) -> (i32, i32) {
    %c0_i32 = arith.constant 0 : i32
    %c0_i32_0 = arith.constant 0 : i32
    %c0_i32_1 = arith.constant 0 : i32
    return %c0_i32, %c0_i32_0 : i32, i32
  }
  func.func @transform_8(%arg0: i32) -> (i32, i32) {
    %c0_i32 = arith.constant 0 : i32
    %c0_i32_0 = arith.constant 0 : i32
    %c0_i32_1 = arith.constant 0 : i32
    return %c0_i32, %c0_i32_0 : i32, i32
  }
  func.func @transform_9(%arg0: i32) -> (i32, i32) {
    %c0_i32 = arith.constant 0 : i32
    %c0_i32_0 = arith.constant 0 : i32
    return %c0_i32, %arg0 : i32, i32
  }
}

</mosaic_0001>

<llo_original>
// kernel: tpu_custom_call.1
$region0: #{tpu_custom_call.1}
  #allocation0 [shape = 'u32[]', space=smem, size = 0x4, offset = 0x4, fixed_abs, tag = 'smem constant byte address 0x4 - core index']
  #allocation1 [shape = 'u32[144,128]{1,0:T(1,128)}', space=vmem, size = 0x12000, scoped, tag = 'internal scratch']
  #allocation2 [shape = 'f32[1,1]{1,0:T(1,128)S(6)}', space=smem, size = 0x200, scoped, tag = 'scoped memory for tpu_custom_call.1']
  %s0 = inlined_call_operand.vmem [shape: bf16[128,16], index: 0, kind: input, shape index: {}]
  %s1 = inlined_call_operand.vmem [shape: bf16[128,8], index: 1, kind: input, shape index: {}]
  %s2 = inlined_call_operand.vmem [shape: bf16[16,256], index: 2, kind: input, shape index: {}]
  %s3 = inlined_call_operand.vmem [shape: bf16[8,256], index: 3, kind: input, shape index: {}]
  %s4 = inlined_call_operand.vmem [shape: f32[1,256], index: 4, kind: input, shape index: {}]
  %s5 = inlined_call_operand.hbm [shape: bf16[256,256], index: 5, kind: input, shape index: {}]
  %s6 = inlined_call_operand.vmem [shape: f32[1,256], index: 6, kind: input, shape index: {}]
  %s7 = inlined_call_operand.vmem [shape: bf16[1,256], index: 7, kind: input, shape index: {}]
  %s8 = inlined_call_operand.<no memory space> [shape: f32[1,1], index: 8, kind: input, shape index: {}]
  %s9 = inlined_call_operand.hbm [shape: f32[1,128], index: 9, kind: output, shape index: {}]
  %s10 = sld [smem:[#allocation0]]
  $region50: #{tpu_custom_call.1} parent=0
    _
  %s12 = ssub.s32 1, %s10
  %s13 = scalar_select 0, %s12, %s10
  %14 = sst [smem:[#allocation2]] %s8
  $region1: #{tpu_custom_call.1} parent=0
    #allocation3 [shape = 'u8[131072]{0}', space=vmem, size = 0x20000, scoped, tag = 'input window, operand 5, single buffered']
    #allocation4 [shape = 's32[1]{0}', space=sflag, size = 0x4, scoped, tag = 'scoped memory for tpu_custom_call.1']
    #allocation5 [shape = 's32[1]{0}', space=sflag, size = 0x4, scoped, tag = 'scoped memory for tpu_custom_call.1']
    #allocation6 [shape = 'u8[512]{0}', space=vmem, size = 0x400, scoped, tag = 'output window, operand 0, single buffered']
    %15 = vsyncpa [#allocation4], 0
    %16 = vsyncpa [#allocation5], 0
    // Predicated region
    $region2: #{tpu_custom_call.1} parent=1 // pred_check
      _
    $region3: #{tpu_custom_call.1} parent=1 // pred_check_branch
      %18 = sbr.rel (0) target = $region5
    $region4: #{tpu_custom_call.1} parent=1 // pred_region
      _
    $region5: #{tpu_custom_call.1} parent=1 // pred_fallthru
      _
    // Predicated region
    $region6: #{tpu_custom_call.1} parent=1 // pred_check
      _
    $region7: #{tpu_custom_call.1} parent=1 // pred_check_branch
      %20 = sbr.rel (0) target = $region9
    $region8: #{tpu_custom_call.1} parent=1 // pred_region
      _
    $region9: #{tpu_custom_call.1} parent=1 // pred_fallthru
      _
    // Predicated region
    $region10: #{tpu_custom_call.1} parent=1 // pred_check
      _
    $region11: #{tpu_custom_call.1} parent=1 // pred_check_branch
      %22 = sbr.rel (0) target = $region13
    $region12: #{tpu_custom_call.1} parent=1 // pred_region
      _
    $region13: #{tpu_custom_call.1} parent=1 // pred_fallthru
      _
    // Predicated region
    $region14: #{tpu_custom_call.1} parent=1 // pred_check
      _
    $region15: #{tpu_custom_call.1} parent=1 // pred_check_branch
      %24 = sbr.rel (0) target = $region17
    $region16: #{tpu_custom_call.1} parent=1 // pred_region
      _
    $region17: #{tpu_custom_call.1} parent=1 // pred_fallthru
      _
    // Predicated region
    $region18: #{tpu_custom_call.1} parent=1 // pred_check
      _
    $region19: #{tpu_custom_call.1} parent=1 // pred_check_branch
      %26 = sbr.rel (0) target = $region21
    $region20: #{tpu_custom_call.1} parent=1 // pred_region
      _
    $region21: #{tpu_custom_call.1} parent=1 // pred_fallthru
      _
    // Predicated region
    $region22: #{tpu_custom_call.1} parent=1 // pred_check
      _
    $region23: #{tpu_custom_call.1} parent=1 // pred_check_branch
      %28 = sbr.rel (0) target = $region25
    $region24: #{tpu_custom_call.1} parent=1 // pred_region
      %s30 = ssub.s32 4096, 4096
      %31 = vsyncadd [#allocation4], %s30
      %s32 = sshll.u32 [#allocation3], 4
      %s33 = int_to_ptr.vmem [resolvable:$true] %s32
      %38 = dma.hbm_to_vmem [thread:$0]  %s5, 4096, %s33, [#allocation4], 128, 128, 8
    $region25: #{tpu_custom_call.1} parent=1 // pred_fallthru
      _
    // Predicated region
    $region26: #{tpu_custom_call.1} parent=1 // pred_check
      _
    $region27: #{tpu_custom_call.1} parent=1 // pred_check_branch
      %40 = sbr.rel (0) target = $region29
    $region28: #{tpu_custom_call.1} parent=1 // pred_region
      _
    $region29: #{tpu_custom_call.1} parent=1 // pred_fallthru
      _
    // Predicated region
    $region30: #{tpu_custom_call.1} parent=1 // pred_check
      _
    $region31: #{tpu_custom_call.1} parent=1 // pred_check_branch
      %42 = sbr.rel (0) target = $region33
    $region32: #{tpu_custom_call.1} parent=1 // pred_region
      _
    $region33: #{tpu_custom_call.1} parent=1 // pred_fallthru
      _
    // Predicated region
    $region34: #{tpu_custom_call.1} parent=1 // pred_check
      _
    $region35: #{tpu_custom_call.1} parent=1 // pred_check_branch
      %44 = sbr.rel (0) target = $region37
    $region36: #{tpu_custom_call.1} parent=1 // pred_region
      _
    $region37: #{tpu_custom_call.1} parent=1 // pred_fallthru
      _
    // Predicated region
    $region38: #{tpu_custom_call.1} parent=1 // pred_check
      _
    $region39: #{tpu_custom_call.1} parent=1 // pred_check_branch
      %46 = sbr.rel (0) target = $region41
    $region40: #{tpu_custom_call.1} parent=1 // pred_region
      %47 = dma.done [#allocation4], 4096
    $region41: #{tpu_custom_call.1} parent=1 // pred_fallthru
      _
    %v49 = vld [vmem:[%s0] sm:$0xf]
    %v50 = vld [vmem:[%s0 + $0x4] sm:$0xf]
    %v51 = vld [vmem:[%s0 + $0x8] sm:$0xf]
    %v52 = vld [vmem:[%s0 + $0xc] sm:$0xf]
    %v53 = vld [vmem:[%s0 + $0x10] sm:$0xf]
    %v54 = vld [vmem:[%s0 + $0x14] sm:$0xf]
    %v55 = vld [vmem:[%s0 + $0x18] sm:$0xf]
    %v56 = vld [vmem:[%s0 + $0x1c] sm:$0xf]
    %v57 = vld [vmem:[%s0 + $0x20] sm:$0xf]
    %v58 = vld [vmem:[%s0 + $0x24] sm:$0xf]
    %v59 = vld [vmem:[%s0 + $0x28] sm:$0xf]
    %v60 = vld [vmem:[%s0 + $0x2c] sm:$0xf]
    %v61 = vld [vmem:[%s0 + $0x30] sm:$0xf]
    %v62 = vld [vmem:[%s0 + $0x34] sm:$0xf]
    %v63 = vld [vmem:[%s0 + $0x38] sm:$0xf]
    %v64 = vld [vmem:[%s0 + $0x3c] sm:$0xf]
    %v65 = vld [vmem:[%s2] sm:$0xff]
    %v66 = vld [vmem:[%s2 + $0x8] sm:$0xff]
    %v67 = vld [vmem:[%s1] sm:$0xf]
    %v68 = vld [vmem:[%s1 + $0x4] sm:$0xf]
    %v69 = vld [vmem:[%s1 + $0x8] sm:$0xf]
    %v70 = vld [vmem:[%s1 + $0xc] sm:$0xf]
    %v71 = vld [vmem:[%s1 + $0x10] sm:$0xf]
    %v72 = vld [vmem:[%s1 + $0x14] sm:$0xf]
    %v73 = vld [vmem:[%s1 + $0x18] sm:$0xf]
    %v74 = vld [vmem:[%s1 + $0x1c] sm:$0xf]
    %v75 = vld [vmem:[%s1 + $0x20] sm:$0xf]
    %v76 = vld [vmem:[%s1 + $0x24] sm:$0xf]
    %v77 = vld [vmem:[%s1 + $0x28] sm:$0xf]
    %v78 = vld [vmem:[%s1 + $0x2c] sm:$0xf]
    %v79 = vld [vmem:[%s1 + $0x30] sm:$0xf]
    %v80 = vld [vmem:[%s1 + $0x34] sm:$0xf]
    %v81 = vld [vmem:[%s1 + $0x38] sm:$0xf]
    %v82 = vld [vmem:[%s1 + $0x3c] sm:$0xf]
    %v83 = vld [vmem:[%s3] sm:$0xff]
    %v100 = vunpack.c.l.b16 %v67
    %v101 = vunpack.c.l.b16 %v68
    %v102 = vunpack.c.l.b16 %v69
    %v103 = vunpack.c.l.b16 %v70
    %v104 = vunpack.c.l.b16 %v71
    %v105 = vunpack.c.l.b16 %v72
    %v106 = vunpack.c.l.b16 %v73
    %v107 = vunpack.c.l.b16 %v74
    %v108 = vunpack.c.l.b16 %v75
    %v109 = vunpack.c.l.b16 %v76
    %v110 = vunpack.c.l.b16 %v77
    %v111 = vunpack.c.l.b16 %v78
    %v112 = vunpack.c.l.b16 %v79
    %v113 = vunpack.c.l.b16 %v80
    %v114 = vunpack.c.l.b16 %v81
    %v115 = vunpack.c.l.b16 %v82
    %v116 = vpack.c.b16 %v101, %v100
    %v117 = vpack.c.b16 %v103, %v102
    %v118 = vpack.c.b16 %v105, %v104
    %v119 = vpack.c.b16 %v107, %v106
    %v120 = vpack.c.b16 %v109, %v108
    %v121 = vpack.c.b16 %v111, %v110
    %v122 = vpack.c.b16 %v113, %v112
    %v123 = vpack.c.b16 %v115, %v114
    %v125 = vunpack.c.l.b16 %v83
    %v126 = vunpack.c.h.b16 %v83
    %v127 = vpack.c.b16 %v125, %v125
    %v128 = vpack.c.b16 %v126, %v126
    %vm129 = vcmask 64512
    %v131 = vsel %vm129, %v116, 0
    %v134 = vsel %vm129, %v117, 0
    %v137 = vsel %vm129, %v118, 0
    %v140 = vsel %vm129, %v119, 0
    %v143 = vsel %vm129, %v120, 0
    %v146 = vsel %vm129, %v121, 0
    %v149 = vsel %vm129, %v122, 0
    %v152 = vsel %vm129, %v123, 0
    %vm154 = vcmask 1043456
    %v156 = vsel %vm154, %v127, 0
    %v159 = vsel %vm154, %v128, 0
    %161 = vmatprep.subr.bf16.mxu0 %v159
    %162 = vmatpush1.bf16.msra.mxu0 %v156
    %163 = vmatprep.subr.bf16.mxu0 0
    %164 = vmatpush1.bf16.msra.mxu0 0
    %165 = vmatprep.subr.bf16.mxu0 0
    %166 = vmatpush1.bf16.msra.mxu0 0
    %167 = vmatprep.subr.bf16.mxu0 0
    %168 = vmatpush1.bf16.msra.mxu0 0
    %169 = vmatprep.subr.bf16.mxu0 0
    %170 = vmatpush1.bf16.msra.mxu0 0
    %171 = vmatprep.subr.bf16.mxu0 0
    %172 = vmatpush1.bf16.msra.mxu0 0
    %173 = vmatprep.subr.bf16.mxu0 0
    %174 = vmatpush1.bf16.msra.mxu0 0
    %175 = vmatprep.subr.bf16.mxu0 0
    %176 = vmatpush1.bf16.msra.mxu0 0
    %177 = vmatprep.subr.bf16.mxu0 0
    %178 = vmatpush1.bf16.msra.mxu0 0
    %179 = vmatprep.subr.bf16.mxu0 0
    %180 = vmatpush1.bf16.msra.mxu0 0
    %181 = vmatprep.subr.bf16.mxu0 0
    %182 = vmatpush1.bf16.msra.mxu0 0
    %183 = vmatprep.subr.bf16.mxu0 0
    %184 = vmatpush1.bf16.msra.mxu0 0
    %185 = vmatprep.subr.bf16.mxu0 0
    %186 = vmatpush1.bf16.msra.mxu0 0
    %187 = vmatprep.subr.bf16.mxu0 0
    %188 = vmatpush1.bf16.msra.mxu0 0
    %189 = vmatprep.subr.bf16.mxu0 0
    %190 = vmatpush1.bf16.msra.mxu0 0
    %191 = vmatprep.subr.bf16.mxu0 0
    %192 = vmatpush1.bf16.msra.mxu0 0
    %193 = vmatprep.mubr.bf16.mxu0 0
    %194 = vmatmul.mubr.bf16.gmra.mrb[0].mxu0 %v131
    %v195 = vpop.f32.mrb[0].mxu0
    %v196 = vadd.f32 0.0, %v195
    %v197 = vpop.f32.mrb[0].mxu0
    %v198 = vadd.f32 0.0, %v197
    %v199 = vpop.f32.mrb[0].mxu0
    %v200 = vadd.f32 0.0, %v199
    %v201 = vpop.f32.mrb[0].mxu0
    %v202 = vadd.f32 0.0, %v201
    %203 = vmatprep.mubr.bf16.mxu0 0
    %204 = vmatmul.mubr.bf16.gmra.mrb[0].mxu0 %v134
    %v205 = vpop.f32.mrb[0].mxu0
    %v206 = vadd.f32 0.0, %v205
    %v207 = vpop.f32.mrb[0].mxu0
    %v208 = vadd.f32 0.0, %v207
    %v209 = vpop.f32.mrb[0].mxu0
    %v210 = vadd.f32 0.0, %v209
    %v211 = vpop.f32.mrb[0].mxu0
    %v212 = vadd.f32 0.0, %v211
    %213 = vmatprep.mubr.bf16.mxu0 0
    %214 = vmatmul.mubr.bf16.gmra.mrb[0].mxu0 %v137
    %v215 = vpop.f32.mrb[0].mxu0
    %v216 = vadd.f32 0.0, %v215
    %v217 = vpop.f32.mrb[0].mxu0
    %v218 = vadd.f32 0.0, %v217
    %v219 = vpop.f32.mrb[0].mxu0
    %v220 = vadd.f32 0.0, %v219
    %v221 = vpop.f32.mrb[0].mxu0
    %v222 = vadd.f32 0.0, %v221
    %223 = vmatprep.mubr.bf16.mxu0 0
    %224 = vmatmul.mubr.bf16.gmra.mrb[0].mxu0 %v140
    %v225 = vpop.f32.mrb[0].mxu0
    %v226 = vadd.f32 0.0, %v225
    %v227 = vpop.f32.mrb[0].mxu0
    %v228 = vadd.f32 0.0, %v227
    %v229 = vpop.f32.mrb[0].mxu0
    %v230 = vadd.f32 0.0, %v229
    %v231 = vpop.f32.mrb[0].mxu0
    %v232 = vadd.f32 0.0, %v231
    %233 = vmatprep.mubr.bf16.mxu0 0
    %234 = vmatmul.mubr.bf16.gmra.mrb[0].mxu0 %v143
    %v235 = vpop.f32.mrb[0].mxu0
    %v236 = vadd.f32 0.0, %v235
    %v237 = vpop.f32.mrb[0].mxu0
    %v238 = vadd.f32 0.0, %v237
    %v239 = vpop.f32.mrb[0].mxu0
    %v240 = vadd.f32 0.0, %v239
    %v241 = vpop.f32.mrb[0].mxu0
    %v242 = vadd.f32 0.0, %v241
    %243 = vmatprep.mubr.bf16.mxu0 0
    %244 = vmatmul.mubr.bf16.gmra.mrb[0].mxu0 %v146
    %v245 = vpop.f32.mrb[0].mxu0
    %v246 = vadd.f32 0.0, %v245
    %v247 = vpop.f32.mrb[0].mxu0
    %v248 = vadd.f32 0.0, %v247
    %v249 = vpop.f32.mrb[0].mxu0
    %v250 = vadd.f32 0.0, %v249
    %v251 = vpop.f32.mrb[0].mxu0
    %v252 = vadd.f32 0.0, %v251
    %253 = vmatprep.mubr.bf16.mxu0 0
    %254 = vmatmul.mubr.bf16.gmra.mrb[0].mxu0 %v149
    %v255 = vpop.f32.mrb[0].mxu0
    %v256 = vadd.f32 0.0, %v255
    %v257 = vpop.f32.mrb[0].mxu0
    %v258 = vadd.f32 0.0, %v257
    %v259 = vpop.f32.mrb[0].mxu0
    %v260 = vadd.f32 0.0, %v259
    %v261 = vpop.f32.mrb[0].mxu0
    %v262 = vadd.f32 0.0, %v261
    %263 = vmatprep.mubr.bf16.mxu0 0
    %264 = vmatmul.mubr.bf16.gmra.mrb[0].mxu0 %v152
    %v265 = vpop.f32.mrb[0].mxu0
    %v266 = vadd.f32 0.0, %v265
    %v267 = vpop.f32.mrb[0].mxu0
    %v268 = vadd.f32 0.0, %v267
    %v269 = vpop.f32.mrb[0].mxu0
    %v270 = vadd.f32 0.0, %v269
    %v271 = vpop.f32.mrb[0].mxu0
    %v272 = vadd.f32 0.0, %v271
    %273 = vdwg.mxu0
    %v290 = vunpack.c.l.b16 %v49
    %v291 = vunpack.c.l.b16 %v50
    %v292 = vunpack.c.l.b16 %v51
    %v293 = vunpack.c.l.b16 %v52
    %v294 = vunpack.c.l.b16 %v53
    %v295 = vunpack.c.l.b16 %v54
    %v296 = vunpack.c.l.b16 %v55
    %v297 = vunpack.c.l.b16 %v56
    %v298 = vunpack.c.l.b16 %v57
    %v299 = vunpack.c.l.b16 %v58
    %v300 = vunpack.c.l.b16 %v59
    %v301 = vunpack.c.l.b16 %v60
    %v302 = vunpack.c.l.b16 %v61
    %v303 = vunpack.c.l.b16 %v62
    %v304 = vunpack.c.l.b16 %v63
    %v305 = vunpack.c.l.b16 %v64
    %v306 = vpack.c.b16 %v291, %v290
    %v307 = vpack.c.b16 %v293, %v292
    %v308 = vpack.c.b16 %v295, %v294
    %v309 = vpack.c.b16 %v297, %v296
    %v310 = vpack.c.b16 %v299, %v298
    %v311 = vpack.c.b16 %v301, %v300
    %v312 = vpack.c.b16 %v303, %v302
    %v313 = vpack.c.b16 %v305, %v304
    %v316 = vunpack.c.l.b16 %v65
    %v317 = vunpack.c.h.b16 %v65
    %v318 = vunpack.c.l.b16 %v66
    %v319 = vunpack.c.h.b16 %v66
    %v320 = vpack.c.b16 %v318, %v316
    %v321 = vpack.c.b16 %v319, %v317
    %vm324 = vcmask 130048
    %v326 = vsel %vm324, %v306, 0
    %v329 = vsel %vm324, %v307, 0
    %v332 = vsel %vm324, %v308, 0
    %v335 = vsel %vm324, %v309, 0
    %v338 = vsel %vm324, %v310, 0
    %v341 = vsel %vm324, %v311, 0
    %v344 = vsel %vm324, %v312, 0
    %v347 = vsel %vm324, %v313, 0
    %349 = vmatprep.subr.bf16.mxu0 %v321
    %350 = vmatpush1.bf16.msra.mxu0 %v320
    %351 = vmatprep.subr.bf16.mxu0 0
    %352 = vmatpush1.bf16.msra.mxu0 0
    %353 = vmatprep.subr.bf16.mxu0 0
    %354 = vmatpush1.bf16.msra.mxu0 0
    %355 = vmatprep.subr.bf16.mxu0 0
    %356 = vmatpush1.bf16.msra.mxu0 0
    %357 = vmatprep.subr.bf16.mxu0 0
    %358 = vmatpush1.bf16.msra.mxu0 0
    %359 = vmatprep.subr.bf16.mxu0 0
    %360 = vmatpush1.bf16.msra.mxu0 0
    %361 = vmatprep.subr.bf16.mxu0 0
    %362 = vmatpush1.bf16.msra.mxu0 0
    %363 = vmatprep.subr.bf16.mxu0 0
    %364 = vmatpush1.bf16.msra.mxu0 0
    %365 = vmatprep.subr.bf16.mxu0 0
    %366 = vmatpush1.bf16.msra.mxu0 0
    %367 = vmatprep.subr.bf16.mxu0 0
    %368 = vmatpush1.bf16.msra.mxu0 0
    %369 = vmatprep.subr.bf16.mxu0 0
    %370 = vmatpush1.bf16.msra.mxu0 0
    %371 = vmatprep.subr.bf16.mxu0 0
    %372 = vmatpush1.bf16.msra.mxu0 0
    %373 = vmatprep.subr.bf16.mxu0 0
    %374 = vmatpush1.bf16.msra.mxu0 0
    %375 = vmatprep.subr.bf16.mxu0 0
    %376 = vmatpush1.bf16.msra.mxu0 0
    %377 = vmatprep.subr.bf16.mxu0 0
    %378 = vmatpush1.bf16.msra.mxu0 0
    %379 = vmatprep.subr.bf16.mxu0 0
    %380 = vmatpush1.bf16.msra.mxu0 0
    %381 = vmatprep.mubr.bf16.mxu0 0
    %382 = vmatmul.mubr.bf16.gmra.mrb[0].mxu0 %v326
    %v383 = vpop.f32.mrb[0].mxu0
    %v384 = vadd.f32 %v196, %v383
    %v385 = vpop.f32.mrb[0].mxu0
    %v386 = vadd.f32 %v198, %v385
    %v387 = vpop.f32.mrb[0].mxu0
    %v388 = vadd.f32 %v200, %v387
    %v389 = vpop.f32.mrb[0].mxu0
    %v390 = vadd.f32 %v202, %v389
    %391 = vmatprep.mubr.bf16.mxu0 0
    %392 = vmatmul.mubr.bf16.gmra.mrb[0].mxu0 %v329
    %v393 = vpop.f32.mrb[0].mxu0
    %v394 = vadd.f32 %v206, %v393
    %v395 = vpop.f32.mrb[0].mxu0
    %v396 = vadd.f32 %v208, %v395
    %v397 = vpop.f32.mrb[0].mxu0
    %v398 = vadd.f32 %v210, %v397
    %v399 = vpop.f32.mrb[0].mxu0
    %v400 = vadd.f32 %v212, %v399
    %401 = vmatprep.mubr.bf16.mxu0 0
    %402 = vmatmul.mubr.bf16.gmra.mrb[0].mxu0 %v332
    %v403 = vpop.f32.mrb[0].mxu0
    %v404 = vadd.f32 %v216, %v403
    %v405 = vpop.f32.mrb[0].mxu0
    %v406 = vadd.f32 %v218, %v405
    %v407 = vpop.f32.mrb[0].mxu0
    %v408 = vadd.f32 %v220, %v407
    %v409 = vpop.f32.mrb[0].mxu0
    %v410 = vadd.f32 %v222, %v409
    %411 = vmatprep.mubr.bf16.mxu0 0
    %412 = vmatmul.mubr.bf16.gmra.mrb[0].mxu0 %v335
    %v413 = vpop.f32.mrb[0].mxu0
    %v414 = vadd.f32 %v226, %v413
    %v415 = vpop.f32.mrb[0].mxu0
    %v416 = vadd.f32 %v228, %v415
    %v417 = vpop.f32.mrb[0].mxu0
    %v418 = vadd.f32 %v230, %v417
    %v419 = vpop.f32.mrb[0].mxu0
    %v420 = vadd.f32 %v232, %v419
    %421 = vmatprep.mubr.bf16.mxu0 0
    %422 = vmatmul.mubr.bf16.gmra.mrb[0].mxu0 %v338
    %v423 = vpop.f32.mrb[0].mxu0
    %v424 = vadd.f32 %v236, %v423
    %v425 = vpop.f32.mrb[0].mxu0
    %v426 = vadd.f32 %v238, %v425
    %v427 = vpop.f32.mrb[0].mxu0
    %v428 = vadd.f32 %v240, %v427
    %v429 = vpop.f32.mrb[0].mxu0
    %v430 = vadd.f32 %v242, %v429
    %431 = vmatprep.mubr.bf16.mxu0 0
    %432 = vmatmul.mubr.bf16.gmra.mrb[0].mxu0 %v341
    %v433 = vpop.f32.mrb[0].mxu0
    %v434 = vadd.f32 %v246, %v433
    %v435 = vpop.f32.mrb[0].mxu0
    %v436 = vadd.f32 %v248, %v435
    %v437 = vpop.f32.mrb[0].mxu0
    %v438 = vadd.f32 %v250, %v437
    %v439 = vpop.f32.mrb[0].mxu0
    %v440 = vadd.f32 %v252, %v439
    %441 = vmatprep.mubr.bf16.mxu0 0
    %442 = vmatmul.mubr.bf16.gmra.mrb[0].mxu0 %v344
    %v443 = vpop.f32.mrb[0].mxu0
    %v444 = vadd.f32 %v256, %v443
    %v445 = vpop.f32.mrb[0].mxu0
    %v446 = vadd.f32 %v258, %v445
    %v447 = vpop.f32.mrb[0].mxu0
    %v448 = vadd.f32 %v260, %v447
    %v449 = vpop.f32.mrb[0].mxu0
    %v450 = vadd.f32 %v262, %v449
    %451 = vmatprep.mubr.bf16.mxu0 0
    %452 = vmatmul.mubr.bf16.gmra.mrb[0].mxu0 %v347
    %v453 = vpop.f32.mrb[0].mxu0
    %v454 = vadd.f32 %v266, %v453
    %v455 = vpop.f32.mrb[0].mxu0
    %v456 = vadd.f32 %v268, %v455
    %v457 = vpop.f32.mrb[0].mxu0
    %v458 = vadd.f32 %v270, %v457
    %v459 = vpop.f32.mrb[0].mxu0
    %v460 = vadd.f32 %v272, %v459
    %461 = vdwg.mxu0
    %v462 = vld [vmem:[%s4] sm:$0x3]
    %v464 = vlaneseq
    %v465 = vshrl.u32 %v464, 7
    %v466 = vsub.s32 0, %v465
    %v467 = vrot.slane %v462, %v466
    %v468 = vlaneseq
    %v469 = vshrl.u32 %v468, 7
    %v470 = vsub.s32 1, %v469
    %v471 = vrot.slane %v462, %v470
    %v474 = vadd.f32 %v384, %v467
    %v475 = vadd.f32 %v386, %v471
    %v476 = vadd.f32 %v388, %v467
    %v477 = vadd.f32 %v390, %v471
    %v478 = vadd.f32 %v394, %v467
    %v479 = vadd.f32 %v396, %v471
    %v480 = vadd.f32 %v398, %v467
    %v481 = vadd.f32 %v400, %v471
    %v482 = vadd.f32 %v404, %v467
    %v483 = vadd.f32 %v406, %v471
    %v484 = vadd.f32 %v408, %v467
    %v485 = vadd.f32 %v410, %v471
    %v486 = vadd.f32 %v414, %v467
    %v487 = vadd.f32 %v416, %v471
    %v488 = vadd.f32 %v418, %v467
    %v489 = vadd.f32 %v420, %v471
    %v490 = vadd.f32 %v424, %v467
    %v491 = vadd.f32 %v426, %v471
    %v492 = vadd.f32 %v428, %v467
    %v493 = vadd.f32 %v430, %v471
    %v494 = vadd.f32 %v434, %v467
    %v495 = vadd.f32 %v436, %v471
    %v496 = vadd.f32 %v438, %v467
    %v497 = vadd.f32 %v440, %v471
    %v498 = vadd.f32 %v444, %v467
    %v499 = vadd.f32 %v446, %v471
    %v500 = vadd.f32 %v448, %v467
    %v501 = vadd.f32 %v450, %v471
    %v502 = vadd.f32 %v454, %v467
    %v503 = vadd.f32 %v456, %v471
    %v504 = vadd.f32 %v458, %v467
    %v505 = vadd.f32 %v460, %v471
    %v506 = vmax.f32 %v474, 0.0
    %v507 = vmax.f32 %v475, 0.0
    %v508 = vmax.f32 %v476, 0.0
    %v509 = vmax.f32 %v477, 0.0
    %v510 = vmax.f32 %v478, 0.0
    %v511 = vmax.f32 %v479, 0.0
    %v512 = vmax.f32 %v480, 0.0
    %v513 = vmax.f32 %v481, 0.0
    %v514 = vmax.f32 %v482, 0.0
    %v515 = vmax.f32 %v483, 0.0
    %v516 = vmax.f32 %v484, 0.0
    %v517 = vmax.f32 %v485, 0.0
    %v518 = vmax.f32 %v486, 0.0
    %v519 = vmax.f32 %v487, 0.0
    %v520 = vmax.f32 %v488, 0.0
    %v521 = vmax.f32 %v489, 0.0
    %v522 = vmax.f32 %v490, 0.0
    %v523 = vmax.f32 %v491, 0.0
    %v524 = vmax.f32 %v492, 0.0
    %v525 = vmax.f32 %v493, 0.0
    %v526 = vmax.f32 %v494, 0.0
    %v527 = vmax.f32 %v495, 0.0
    %v528 = vmax.f32 %v496, 0.0
    %v529 = vmax.f32 %v497, 0.0
    %v530 = vmax.f32 %v498, 0.0
    %v531 = vmax.f32 %v499, 0.0
    %v532 = vmax.f32 %v500, 0.0
    %v533 = vmax.f32 %v501, 0.0
    %v534 = vmax.f32 %v502, 0.0
    %v535 = vmax.f32 %v503, 0.0
    %v536 = vmax.f32 %v504, 0.0
    %v537 = vmax.f32 %v505, 0.0
    %v538 = vpack.c.bf16 %v508, %v506
    %v539 = vpack.c.bf16 %v509, %v507
    %v540 = vpack.c.bf16 %v512, %v510
    %v541 = vpack.c.bf16 %v513, %v511
    %v542 = vpack.c.bf16 %v516, %v514
    %v543 = vpack.c.bf16 %v517, %v515
    %v544 = vpack.c.bf16 %v520, %v518
    %v545 = vpack.c.bf16 %v521, %v519
    %v546 = vpack.c.bf16 %v524, %v522
    %v547 = vpack.c.bf16 %v525, %v523
    %v548 = vpack.c.bf16 %v528, %v526
    %v549 = vpack.c.bf16 %v529, %v527
    %v550 = vpack.c.bf16 %v532, %v530
    %v551 = vpack.c.bf16 %v533, %v531
    %v552 = vpack.c.bf16 %v536, %v534
    %v553 = vpack.c.bf16 %v537, %v535
    %v554 = vld [vmem:[#allocation3] sm:$0xff]
    %v555 = vld [vmem:[#allocation3 + $0x8] sm:$0xff]
    %v556 = vld [vmem:[#allocation3 + $0x10] sm:$0xff]
    %v557 = vld [vmem:[#allocation3 + $0x18] sm:$0xff]
    %v558 = vld [vmem:[#allocation3 + $0x20] sm:$0xff]
    %v559 = vld [vmem:[#allocation3 + $0x28] sm:$0xff]
    %v560 = vld [vmem:[#allocation3 + $0x30] sm:$0xff]
    %v561 = vld [vmem:[#allocation3 + $0x38] sm:$0xff]
    %v562 = vld [vmem:[#allocation3 + $0x40] sm:$0xff]
    %v563 = vld [vmem:[#allocation3 + $0x48] sm:$0xff]
    %v564 = vld [vmem:[#allocation3 + $0x50] sm:$0xff]
    %v565 = vld [vmem:[#allocation3 + $0x58] sm:$0xff]
    %v566 = vld [vmem:[#allocation3 + $0x60] sm:$0xff]
    %v567 = vld [vmem:[#allocation3 + $0x68] sm:$0xff]
    %v568 = vld [vmem:[#allocation3 + $0x70] sm:$0xff]
    %v569 = vld [vmem:[#allocation3 + $0x78] sm:$0xff]
    %v570 = vld [vmem:[#allocation3 + $0x80] sm:$0xff]
    %v571 = vld [vmem:[#allocation3 + $0x88] sm:$0xff]
    %v572 = vld [vmem:[#allocation3 + $0x90] sm:$0xff]
    %v573 = vld [vmem:[#allocation3 + $0x98] sm:$0xff]
    %v574 = vld [vmem:[#allocation3 + $0xa0] sm:$0xff]
    %v575 = vld [vmem:[#allocation3 + $0xa8] sm:$0xff]
    %v576 = vld [vmem:[#allocation3 + $0xb0] sm:$0xff]
    %v577 = vld [vmem:[#allocation3 + $0xb8] sm:$0xff]
    %v578 = vld [vmem:[#allocation3 + $0xc0] sm:$0xff]
    %v579 = vld [vmem:[#allocation3 + $0xc8] sm:$0xff]
    %v580 = vld [vmem:[#allocation3 + $0xd0] sm:$0xff]
    %v581 = vld [vmem:[#allocation3 + $0xd8] sm:$0xff]
    %v582 = vld [vmem:[#allocation3 + $0xe0] sm:$0xff]
    %v583 = vld [vmem:[#allocation3 + $0xe8] sm:$0xff]
    %v584 = vld [vmem:[#allocation3 + $0xf0] sm:$0xff]
    %v585 = vld [vmem:[#allocation3 + $0xf8] sm:$0xff]
    %v586 = vld [vmem:[%s6] sm:$0x3]
    %v588 = vlaneseq
    %v589 = vshrl.u32 %v588, 7
    %v590 = vsub.s32 0, %v589
    %v591 = vrot.slane %v586, %v590
    %v592 = vlaneseq
    %v593 = vshrl.u32 %v592, 7
    %v594 = vsub.s32 1, %v593
    %v595 = vrot.slane %v586, %v594
    %v630 = vunpack.c.l.b16 %v554
    %v631 = vunpack.c.h.b16 %v554
    %v632 = vunpack.c.l.b16 %v555
    %v633 = vunpack.c.h.b16 %v555
    %v634 = vunpack.c.l.b16 %v556
    %v635 = vunpack.c.h.b16 %v556
    %v636 = vunpack.c.l.b16 %v557
    %v637 = vunpack.c.h.b16 %v557
    %v638 = vunpack.c.l.b16 %v558
    %v639 = vunpack.c.h.b16 %v558
    %v640 = vunpack.c.l.b16 %v559
    %v641 = vunpack.c.h.b16 %v559
    %v642 = vunpack.c.l.b16 %v560
    %v643 = vunpack.c.h.b16 %v560
    %v644 = vunpack.c.l.b16 %v561
    %v645 = vunpack.c.h.b16 %v561
    %v646 = vunpack.c.l.b16 %v562
    %v647 = vunpack.c.h.b16 %v562
    %v648 = vunpack.c.l.b16 %v563
    %v649 = vunpack.c.h.b16 %v563
    %v650 = vunpack.c.l.b16 %v564
    %v651 = vunpack.c.h.b16 %v564
    %v652 = vunpack.c.l.b16 %v565
    %v653 = vunpack.c.h.b16 %v565
    %v654 = vunpack.c.l.b16 %v566
    %v655 = vunpack.c.h.b16 %v566
    %v656 = vunpack.c.l.b16 %v567
    %v657 = vunpack.c.h.b16 %v567
    %v658 = vunpack.c.l.b16 %v568
    %v659 = vunpack.c.h.b16 %v568
    %v660 = vunpack.c.l.b16 %v569
    %v661 = vunpack.c.h.b16 %v569
    %v662 = vunpack.c.l.b16 %v570
    %v663 = vunpack.c.h.b16 %v570
    %v664 = vunpack.c.l.b16 %v571
    %v665 = vunpack.c.h.b16 %v571
    %v666 = vunpack.c.l.b16 %v572
    %v667 = vunpack.c.h.b16 %v572
    %v668 = vunpack.c.l.b16 %v573
    %v669 = vunpack.c.h.b16 %v573
    %v670 = vunpack.c.l.b16 %v574
    %v671 = vunpack.c.h.b16 %v574
    %v672 = vunpack.c.l.b16 %v575
    %v673 = vunpack.c.h.b16 %v575
    %v674 = vunpack.c.l.b16 %v576
    %v675 = vunpack.c.h.b16 %v576
    %v676 = vunpack.c.l.b16 %v577
    %v677 = vunpack.c.h.b16 %v577
    %v678 = vunpack.c.l.b16 %v578
    %v679 = vunpack.c.h.b16 %v578
    %v680 = vunpack.c.l.b16 %v579
    %v681 = vunpack.c.h.b16 %v579
    %v682 = vunpack.c.l.b16 %v580
    %v683 = vunpack.c.h.b16 %v580
    %v684 = vunpack.c.l.b16 %v581
    %v685 = vunpack.c.h.b16 %v581
    %v686 = vunpack.c.l.b16 %v582
    %v687 = vunpack.c.h.b16 %v582
    %v688 = vunpack.c.l.b16 %v583
    %v689 = vunpack.c.h.b16 %v583
    %v690 = vunpack.c.l.b16 %v584
    %v691 = vunpack.c.h.b16 %v584
    %v692 = vunpack.c.l.b16 %v585
    %v693 = vunpack.c.h.b16 %v585
    %v694 = vpack.c.b16 %v632, %v630
    %v695 = vpack.c.b16 %v633, %v631
    %v696 = vpack.c.b16 %v636, %v634
    %v697 = vpack.c.b16 %v637, %v635
    %v698 = vpack.c.b16 %v640, %v638
    %v699 = vpack.c.b16 %v641, %v639
    %v700 = vpack.c.b16 %v644, %v642
    %v701 = vpack.c.b16 %v645, %v643
    %v702 = vpack.c.b16 %v648, %v646
    %v703 = vpack.c.b16 %v649, %v647
    %v704 = vpack.c.b16 %v652, %v650
    %v705 = vpack.c.b16 %v653, %v651
    %v706 = vpack.c.b16 %v656, %v654
    %v707 = vpack.c.b16 %v657, %v655
    %v708 = vpack.c.b16 %v660, %v658
    %v709 = vpack.c.b16 %v661, %v659
    %v710 = vpack.c.b16 %v664, %v662
    %v711 = vpack.c.b16 %v665, %v663
    %v712 = vpack.c.b16 %v668, %v666
    %v713 = vpack.c.b16 %v669, %v667
    %v714 = vpack.c.b16 %v672, %v670
    %v715 = vpack.c.b16 %v673, %v671
    %v716 = vpack.c.b16 %v676, %v674
    %v717 = vpack.c.b16 %v677, %v675
    %v718 = vpack.c.b16 %v680, %v678
    %v719 = vpack.c.b16 %v681, %v679
    %v720 = vpack.c.b16 %v684, %v682
    %v721 = vpack.c.b16 %v685, %v683
    %v722 = vpack.c.b16 %v688, %v686
    %v723 = vpack.c.b16 %v689, %v687
    %v724 = vpack.c.b16 %v692, %v690
    %v725 = vpack.c.b16 %v693, %v691
    %758 = vmatprep.subr.bf16.mxu0 %v695
    %759 = vmatpush1.bf16.msra.mxu0 %v694
    %760 = vmatprep.subr.bf16.mxu0 %v697
    %761 = vmatpush1.bf16.msra.mxu0 %v696
    %762 = vmatprep.subr.bf16.mxu0 %v699
    %763 = vmatpush1.bf16.msra.mxu0 %v698
    %764 = vmatprep.subr.bf16.mxu0 %v701
    %765 = vmatpush1.bf16.msra.mxu0 %v700
    %766 = vmatprep.subr.bf16.mxu0 %v703
    %767 = vmatpush1.bf16.msra.mxu0 %v702
    %768 = vmatprep.subr.bf16.mxu0 %v705
    %769 = vmatpush1.bf16.msra.mxu0 %v704
    %770 = vmatprep.subr.bf16.mxu0 %v707
    %771 = vmatpush1.bf16.msra.mxu0 %v706
    %772 = vmatprep.subr.bf16.mxu0 %v709
    %773 = vmatpush1.bf16.msra.mxu0 %v708
    %774 = vmatprep.subr.bf16.mxu0 %v711
    %775 = vmatpush1.bf16.msra.mxu0 %v710
    %776 = vmatprep.subr.bf16.mxu0 %v713
    %777 = vmatpush1.bf16.msra.mxu0 %v712
    %778 = vmatprep.subr.bf16.mxu0 %v715
    %779 = vmatpush1.bf16.msra.mxu0 %v714
    %780 = vmatprep.subr.bf16.mxu0 %v717
    %781 = vmatpush1.bf16.msra.mxu0 %v716
    %782 = vmatprep.subr.bf16.mxu0 %v719
    %783 = vmatpush1.bf16.msra.mxu0 %v718
    %784 = vmatprep.subr.bf16.mxu0 %v721
    %785 = vmatpush1.bf16.msra.mxu0 %v720
    %786 = vmatprep.subr.bf16.mxu0 %v723
    %787 = vmatpush1.bf16.msra.mxu0 %v722
    %788 = vmatprep.subr.bf16.mxu0 %v725
    %789 = vmatpush1.bf16.msra.mxu0 %v724
    %790 = vmatprep.mubr.bf16.mxu0 %v539
    %791 = vmatmul.mubr.bf16.gmra.mrb[0].mxu0 %v538
    %v792 = vpop.f32.mrb[0].mxu0
    %v793 = vadd.f32 %v591, %v792
    %v794 = vpop.f32.mrb[0].mxu0
    %v795 = vadd.f32 %v595, %v794
    %v796 = vpop.f32.mrb[0].mxu0
    %v797 = vadd.f32 %v591, %v796
    %v798 = vpop.f32.mrb[0].mxu0
    %v799 = vadd.f32 %v595, %v798
    %800 = vmatprep.mubr.bf16.mxu0 %v541
    %801 = vmatmul.mubr.bf16.gmra.mrb[0].mxu0 %v540
    %v802 = vpop.f32.mrb[0].mxu0
    %v803 = vadd.f32 %v591, %v802
    %v804 = vpop.f32.mrb[0].mxu0
    %v805 = vadd.f32 %v595, %v804
    %v806 = vpop.f32.mrb[0].mxu0
    %v807 = vadd.f32 %v591, %v806
    %v808 = vpop.f32.mrb[0].mxu0
    %v809 = vadd.f32 %v595, %v808
    %810 = vmatprep.mubr.bf16.mxu0 %v543
    %811 = vmatmul.mubr.bf16.gmra.mrb[0].mxu0 %v542
    %v812 = vpop.f32.mrb[0].mxu0
    %v813 = vadd.f32 %v591, %v812
    %v814 = vpop.f32.mrb[0].mxu0
    %v815 = vadd.f32 %v595, %v814
    %v816 = vpop.f32.mrb[0].mxu0
    %v817 = vadd.f32 %v591, %v816
    %v818 = vpop.f32.mrb[0].mxu0
    %v819 = vadd.f32 %v595, %v818
    %820 = vmatprep.mubr.bf16.mxu0 %v545
    %821 = vmatmul.mubr.bf16.gmra.mrb[0].mxu0 %v544
    %v822 = vpop.f32.mrb[0].mxu0
    %v823 = vadd.f32 %v591, %v822
    %v824 = vpop.f32.mrb[0].mxu0
    %v825 = vadd.f32 %v595, %v824
    %v826 = vpop.f32.mrb[0].mxu0
    %v827 = vadd.f32 %v591, %v826
    %v828 = vpop.f32.mrb[0].mxu0
    %v829 = vadd.f32 %v595, %v828
    %830 = vmatprep.mubr.bf16.mxu0 %v547
    %831 = vmatmul.mubr.bf16.gmra.mrb[0].mxu0 %v546
    %v832 = vpop.f32.mrb[0].mxu0
    %v833 = vadd.f32 %v591, %v832
    %v834 = vpop.f32.mrb[0].mxu0
    %v835 = vadd.f32 %v595, %v834
    %v836 = vpop.f32.mrb[0].mxu0
    %v837 = vadd.f32 %v591, %v836
    %v838 = vpop.f32.mrb[0].mxu0
    %v839 = vadd.f32 %v595, %v838
    %840 = vmatprep.mubr.bf16.mxu0 %v549
    %841 = vmatmul.mubr.bf16.gmra.mrb[0].mxu0 %v548
    %v842 = vpop.f32.mrb[0].mxu0
    %v843 = vadd.f32 %v591, %v842
    %v844 = vpop.f32.mrb[0].mxu0
    %v845 = vadd.f32 %v595, %v844
    %v846 = vpop.f32.mrb[0].mxu0
    %v847 = vadd.f32 %v591, %v846
    %v848 = vpop.f32.mrb[0].mxu0
    %v849 = vadd.f32 %v595, %v848
    %850 = vmatprep.mubr.bf16.mxu0 %v551
    %851 = vmatmul.mubr.bf16.gmra.mrb[0].mxu0 %v550
    %v852 = vpop.f32.mrb[0].mxu0
    %v853 = vadd.f32 %v591, %v852
    %v854 = vpop.f32.mrb[0].mxu0
    %v855 = vadd.f32 %v595, %v854
    %v856 = vpop.f32.mrb[0].mxu0
    %v857 = vadd.f32 %v591, %v856
    %v858 = vpop.f32.mrb[0].mxu0
    %v859 = vadd.f32 %v595, %v858
    %860 = vmatprep.mubr.bf16.mxu0 %v553
    %861 = vmatmul.mubr.bf16.gmra.mrb[0].mxu0 %v552
    %v862 = vpop.f32.mrb[0].mxu0
    %v863 = vadd.f32 %v591, %v862
    %v864 = vpop.f32.mrb[0].mxu0
    %v865 = vadd.f32 %v595, %v864
    %v866 = vpop.f32.mrb[0].mxu0
    %v867 = vadd.f32 %v591, %v866
    %v868 = vpop.f32.mrb[0].mxu0
    %v869 = vadd.f32 %v595, %v868
    %870 = vdwg.mxu0
    %v871 = vmax.f32 %v793, 0.0
    %v872 = vmax.f32 %v795, 0.0
    %v873 = vmax.f32 %v797, 0.0
    %v874 = vmax.f32 %v799, 0.0
    %v875 = vmax.f32 %v803, 0.0
    %v876 = vmax.f32 %v805, 0.0
    %v877 = vmax.f32 %v807, 0.0
    %v878 = vmax.f32 %v809, 0.0
    %v879 = vmax.f32 %v813, 0.0
    %v880 = vmax.f32 %v815, 0.0
    %v881 = vmax.f32 %v817, 0.0
    %v882 = vmax.f32 %v819, 0.0
    %v883 = vmax.f32 %v823, 0.0
    %v884 = vmax.f32 %v825, 0.0
    %v885 = vmax.f32 %v827, 0.0
    %v886 = vmax.f32 %v829, 0.0
    %v887 = vmax.f32 %v833, 0.0
    %v888 = vmax.f32 %v835, 0.0
    %v889 = vmax.f32 %v837, 0.0
    %v890 = vmax.f32 %v839, 0.0
    %v891 = vmax.f32 %v843, 0.0
    %v892 = vmax.f32 %v845, 0.0
    %v893 = vmax.f32 %v847, 0.0
    %v894 = vmax.f32 %v849, 0.0
    %v895 = vmax.f32 %v853, 0.0
    %v896 = vmax.f32 %v855, 0.0
    %v897 = vmax.f32 %v857, 0.0
    %v898 = vmax.f32 %v859, 0.0
    %v899 = vmax.f32 %v863, 0.0
    %v900 = vmax.f32 %v865, 0.0
    %v901 = vmax.f32 %v867, 0.0
    %v902 = vmax.f32 %v869, 0.0
    %v903 = vpack.c.bf16 %v873, %v871
    %v904 = vpack.c.bf16 %v874, %v872
    %v905 = vpack.c.bf16 %v877, %v875
    %v906 = vpack.c.bf16 %v878, %v876
    %v907 = vpack.c.bf16 %v881, %v879
    %v908 = vpack.c.bf16 %v882, %v880
    %v909 = vpack.c.bf16 %v885, %v883
    %v910 = vpack.c.bf16 %v886, %v884
    %v911 = vpack.c.bf16 %v889, %v887
    %v912 = vpack.c.bf16 %v890, %v888
    %v913 = vpack.c.bf16 %v893, %v891
    %v914 = vpack.c.bf16 %v894, %v892
    %v915 = vpack.c.bf16 %v897, %v895
    %v916 = vpack.c.bf16 %v898, %v896
    %v917 = vpack.c.bf16 %v901, %v899
    %v918 = vpack.c.bf16 %v902, %v900
    %v919 = vld [vmem:[%s7] sm:$0x3]
    %s920 = sld [smem:[#allocation2]]
    %v921 = vstv %s920
    %v924 = vunpack.c.l.s4 1966171168
    %v925 = vunpack.c.0.s8 %v924
    %v926 = vlaneseq
    %v927 = vshrl.u32 %v926, 7
    %v928 = vsub.s32 %v925, %v927
    %v929 = vrot.slane %v919, %v928
    %v930 = vcombine.high %v929, %v929
    %v932 = vunpack.c.l.s4 1966171168
    %v933 = vunpack.c.0.s8 %v932
    %v934 = vlaneseq
    %v935 = vshrl.u32 %v934, 7
    %v936 = vsub.s32 %v933, %v935
    %v937 = vrot.slane %v929, %v936
    %v939 = vunpack.c.l.s4 1966171168
    %v940 = vunpack.c.0.s8 %v939
    %v941 = vlaneseq
    %v942 = vshrl.u32 %v941, 7
    %v943 = vsub.s32 %v940, %v942
    %v944 = vrot.slane %v930, %v943
    %947 = vmatprep.subr.bf16.mxu0 %v904
    %948 = vmatpush1.bf16.xpose.msra.mxu0 %v903
    %949 = vmatprep.subr.bf16.mxu0 %v906
    %950 = vmatpush1.bf16.xpose.msra.mxu0 %v905
    %951 = vmatprep.subr.bf16.mxu0 %v908
    %952 = vmatpush1.bf16.xpose.msra.mxu0 %v907
    %953 = vmatprep.subr.bf16.mxu0 %v910
    %954 = vmatpush1.bf16.xpose.msra.mxu0 %v909
    %955 = vmatprep.subr.bf16.mxu0 %v912
    %956 = vmatpush1.bf16.xpose.msra.mxu0 %v911
    %957 = vmatprep.subr.bf16.mxu0 %v914
    %958 = vmatpush1.bf16.xpose.msra.mxu0 %v913
    %959 = vmatprep.subr.bf16.mxu0 %v916
    %960 = vmatpush1.bf16.xpose.msra.mxu0 %v915
    %961 = vmatprep.subr.bf16.mxu0 %v918
    %962 = vmatpush1.bf16.xpose.msra.mxu0 %v917
    %963 = vmatprep.subr.bf16.mxu0 0
    %964 = vmatpush1.bf16.xpose.msra.mxu0 0
    %965 = vmatprep.subr.bf16.mxu0 0
    %966 = vmatpush1.bf16.xpose.msra.mxu0 0
    %967 = vmatprep.subr.bf16.mxu0 0
    %968 = vmatpush1.bf16.xpose.msra.mxu0 0
    %969 = vmatprep.subr.bf16.mxu0 0
    %970 = vmatpush1.bf16.xpose.msra.mxu0 0
    %971 = vmatprep.subr.bf16.mxu0 0
    %972 = vmatpush1.bf16.xpose.msra.mxu0 0
    %973 = vmatprep.subr.bf16.mxu0 0
    %974 = vmatpush1.bf16.xpose.msra.mxu0 0
    %975 = vmatprep.subr.bf16.mxu0 0
    %976 = vmatpush1.bf16.xpose.msra.mxu0 0
    %977 = vmatprep.subr.bf16.mxu0 0
    %978 = vmatpush1.bf16.xpose.msra.mxu0 0
    %979 = vmatprep.mubr.bf16.mxu0 %v944
    %980 = vmatmul.mubr.bf16.gmra.mrb[0].mxu0 %v937
    %v981 = vpop.f32.mrb[0].mxu0
    %v982 = vadd.f32 %v921, %v981
    %v983 = vpop.f32.mrb[0].mxu0
    %v984 = vpop.f32.mrb[0].mxu0
    %v985 = vpop.f32.mrb[0].mxu0
    %986 = vdwg.mxu0
    %987 = vst [vmem:[#allocation6] sm:$0x1] %v982
    // Predicated region
    $region42: #{tpu_custom_call.1} parent=1 // pred_check
      _
    $region43: #{tpu_custom_call.1} parent=1 // pred_check_branch
      %989 = sbr.rel (0) target = $region45
    $region44: #{tpu_custom_call.1} parent=1 // pred_region
      %s991 = ssub.s32 16, 16
      %992 = vsyncadd [#allocation5], %s991
      %s994 = sshll.u32 [#allocation6], 4
      %s995 = int_to_ptr.vmem [resolvable:$true] %s994
      %997 = dma.vmem_to_hbm [thread:$0]  %s995, 16, %s9, [#allocation5]
    $region45: #{tpu_custom_call.1} parent=1 // pred_fallthru
      _
    // Predicated region
    $region46: #{tpu_custom_call.1} parent=1 // pred_check
      _
    $region47: #{tpu_custom_call.1} parent=1 // pred_check_branch
      %999 = sbr.rel (0) target = $region49
    $region48: #{tpu_custom_call.1} parent=1 // pred_region
      %1000 = dma.done [#allocation5], 16
    $region49: #{tpu_custom_call.1} parent=1 // pred_fallthru
      _
    %1001 = vsyncpa [#allocation4], 1
    %1002 = vsyncpa [#allocation5], 1

</llo_original>
